<compile_context>
chip_gen: v7x
topology: tpu7x:2x2x1
jax: 0.10.0
libtpu: 0.0.40
codegen_flags: <defaults>
</compile_context>

<pallas_src>
import functools

import numpy as np
import jax
import jax.numpy as jnp
from jax.experimental import pallas as pl
from jax.experimental.pallas import tpu as pltpu


def _round_up(x, m):
    return ((x + m - 1) // m) * m


def _phase_deconv_kernel(x_ref, w_ref, b_ref, o_ref, *, n_phase, stride, pad_left, halo):
    """One (batch, time-tile) grid step of the phase-decomposed ConvTranspose1d.

    x_ref: (1, C, L_x)     VMEM  padded, native-layout activations (resident per batch elem)
    w_ref: (n_phase*S, C)  VMEM  transposed, phase-concatenated filters (resident)
    b_ref: (1, 1)          SMEM  scalar bias
    o_ref: (1, S, tm)      VMEM  output tile: S phase rows x tm time steps (lane-dense store)
    """
    S = stride
    tm = o_ref.shape[2]
    m0 = pl.multiple_of(pl.program_id(1) * tm, 128)          # lane-aligned tile start

    xs = x_ref[0, :, pl.ds(m0, tm + halo)]                   # (C, tm+halo), aligned lane slice
    # Single wide matmul; f32 accumulation on the MXU.
    p = jnp.dot(w_ref[...], xs, preferred_element_type=jnp.float32)  # (n_phase*S, tm+halo)

    # Overlap-add: shift the small result along lanes per phase (cheap, XLU side).
    acc = None
    for j in range(n_phase):                                 # static unroll, n_phase is tiny (~2)
        cj = 1 - j + pad_left                                # static shift, 0 <= cj <= halo
        part = p[j * S:(j + 1) * S, cj:cj + tm]              # (S, tm)
        acc = part if acc is None else acc + part

    o_ref[0, :, :] = (acc + b_ref[0, 0]).astype(o_ref.dtype)


def speech_decoder_forward(X, weight, bias, stride, *, tile_m=512,
                           compute_dtype=jnp.bfloat16):
    """Pallas implementation of SpeechDecoder.forward.

    X:      (N, C, L_in)
    weight: (C, 1, K)    nn.ConvTranspose1d(C, 1, K) weight layout
    bias:   (1,)
    returns (N, 1, L_out) with L_out = (L_in - 1)*stride - 2*stride + K
    """
    N, C, L_in = X.shape
    K = int(weight.shape[2])
    S = int(stride)
    padding = S                                   # the module hard-codes padding = stride
    L_out = (L_in - 1) * S - 2 * padding + K
    assert L_out > 0, "invalid (L_in, kernel_size, stride) combination"

    n_phase = -(-K // S)                          # ceil(K / S)
    KP = n_phase * S
    pad_left = max(0, n_phase - 2)

    # Phase-concatenated, transposed filters: w_t[j*S + r, c] = weight[c, 0, j*S + r] (zero-padded).
    w_t = jnp.pad(weight[:, 0, :], ((0, 0), (0, KP - K))).T.astype(compute_dtype)   # (KP, C)

    # Output organised as phase rows: row m holds output samples [m*S, (m+1)*S).
    M_out = L_in - 3 + n_phase
    tm = min(_round_up(tile_m, 128), _round_up(M_out, 128))
    M_pad = _round_up(M_out, tm)

    halo = _round_up(1 + pad_left, 128)           # lane halo past each tile; keeps slices aligned
    L_x = M_pad + halo
    right_pad = L_x - pad_left - L_in
    assert right_pad >= 0

    # Native-layout x, padded along time only (one fused cast+pad pass; NO transpose of X).
    x_p = jnp.pad(X.astype(compute_dtype), ((0, 0), (0, 0), (pad_left, right_pad)))

    b_smem = jnp.asarray(bias, jnp.float32).reshape(1, 1)

    out_dtype = X.dtype
    grid = (N, M_pad // tm)

    itemsize = jnp.dtype(compute_dtype).itemsize
    x_blk_bytes = C * L_x * itemsize
    w_bytes = KP * C * itemsize
    o_blk_bytes = S * tm * jnp.dtype(out_dtype).itemsize
    # TODO(synk): single-buffer the resident x block (pipeline_mode=pl.Buffered(1)) once
    # buffer_count=1 lowering is confirmed; it only changes per batch element.  For very long
    # utterances on v7x (64 MiB VMEM), fall back to tiling L with a manual halo DMA.
    vmem_need = 2 * (x_blk_bytes + w_bytes + o_blk_bytes)          # pipeline double-buffers
    vmem_limit = int(min(112 << 20, max(vmem_need + (16 << 20), 24 << 20)))

    flops = 2 * N * (M_pad // tm) * KP * C * (tm + halo)
    bytes_accessed = (x_p.size * itemsize + w_t.size * itemsize
                      + N * S * M_pad * jnp.dtype(out_dtype).itemsize)

    kernel = functools.partial(_phase_deconv_kernel, n_phase=n_phase, stride=S,
                               pad_left=pad_left, halo=halo)

    # Prefer sharding the batch axis across TensorCores (v7x megacore) so the resident x
    # block is not duplicated per core; fall back to m-tile parallelism when N == 1.
    dim_sem = ("parallel", "parallel") if N == 1 else ("parallel", "arbitrary")

    out = pl.pallas_call(
        kernel,
        out_shape=jax.ShapeDtypeStruct((N, S, M_pad), out_dtype),
        grid=grid,
        in_specs=[
            # x: resident per batch element (block index changes only with n -> DMA'd once per n)
            pl.BlockSpec((1, C, L_x), lambda n, i: (n, 0, 0)),
            # tiny phase-concatenated filters, fully resident
            pl.BlockSpec((KP, C), lambda n, i: (0, 0)),
            # scalar bias in SMEM
            pl.BlockSpec((1, 1), lambda n, i: (0, 0), memory_space=pltpu.SMEM),
        ],
        # lane-dense output tile: time (tm, multiple of 128) in lanes
        out_specs=pl.BlockSpec((1, S, tm), lambda n, i: (n, 0, i)),
        compiler_params=pltpu.CompilerParams(
            dimension_semantics=dim_sem,
            vmem_limit_bytes=vmem_limit,
        ),
        cost_estimate=pl.CostEstimate(
            flops=flops, transcendentals=0, bytes_accessed=bytes_accessed),
    )(x_p, w_t, b_smem)

    # out[n, r, m] = y[n, m*S + r]; the 1-channel output transpose/reshape is tiny.
    y = jnp.transpose(out, (0, 2, 1)).reshape(N, M_pad * S)[:, :L_out]
    return y.reshape(N, 1, L_out).astype(X.dtype)


def _reference_conv_transpose1d(x, w, b, stride, padding):
    """Direct numpy reference of nn.ConvTranspose1d(C, 1, K, stride, padding)."""
    x = np.asarray(x, np.float64)
    w = np.asarray(w, np.float64)
    b = np.asarray(b, np.float64)
    N, C, L = x.shape
    K = w.shape[2]
    L_full = (L - 1) * stride + K
    L_out = (L - 1) * stride - 2 * padding + K
    y_full = np.zeros((N, L_full), dtype=np.float64)
    for n in range(N):
        for c in range(C):
            for l in range(L):
                y_full[n, l * stride:l * stride + K] += x[n, c, l] * w[c, 0, :]
    y = y_full[:, padding:padding + L_out] + b[0]
    return y[:, None, :].astype(np.float32)


if __name__ == "__main__":
    # Small, ConvTranspose1d-consistent shapes.
    N, C, L_in = 2, 4, 16
    kernel_size, stride = 8, 4            # padding = stride = 4 per the module

    key = jax.random.PRNGKey(0)
    kx, kw, kb = jax.random.split(key, 3)
    X = jax.random.normal(kx, (N, C, L_in), dtype=jnp.float32)
    # Deterministic parameter init (synthetic; shapes follow nn.ConvTranspose1d(C, 1, K)).
    bound = 1.0 / np.sqrt(C * kernel_size)
    weight = jax.random.uniform(kw, (C, 1, kernel_size), jnp.float32, -bound, bound)
    bias = jax.random.uniform(kb, (1,), jnp.float32, -bound, bound)

    y = speech_decoder_forward(X, weight, bias, stride)
    y = jax.block_until_ready(y)

    # Reference uses the same bf16-rounded inputs (the kernel accumulates in f32).
    X_r = np.asarray(X.astype(jnp.bfloat16).astype(jnp.float32))
    W_r = np.asarray(weight.astype(jnp.bfloat16).astype(jnp.float32))
    y_ref = _reference_conv_transpose1d(X_r, W_r, np.asarray(bias), stride, padding=stride)

    assert y.shape == y_ref.shape, (y.shape, y_ref.shape)
    np.testing.assert_allclose(np.asarray(y), y_ref, rtol=1e-4, atol=1e-4)

    print("KERNEL_OK")
</pallas_src>

<mosaic_0001>
module attributes {stable_mosaic.version = 11 : i64} {
  func.func @_phase_deconv_kernel(%arg0: i32, %arg1: i32, %arg2: memref<1x4x256xbf16, #tpu.memory_space<vmem>>, %arg3: memref<8x4xbf16, #tpu.memory_space<vmem>>, %arg4: memref<1x1xf32, #tpu.memory_space<smem>>, %arg5: memref<1x4x128xf32, #tpu.memory_space<vmem>>) attributes {dimension_semantics = [#tpu.dimension_semantics<parallel>, #tpu.dimension_semantics<arbitrary>], iteration_bounds = array<i64: 2, 1>, scalar_prefetch = 0 : i64, scratch_operands = 0 : i64, tpu.core_type = #tpu.core_type<tc>, window_params = [{transform_indices = @transform_0, window_bounds = array<i64: 1, 4, 256>}, {pipeline_mode = #tpu.pipeline_mode<synchronous>, transform_indices = @transform_1, window_bounds = array<i64: 8, 4>}, {transform_indices = @transform_2, window_bounds = array<i64: 1, 1>}, {transform_indices = @transform_3, window_bounds = array<i64: 1, 4, 128>}]} {
    %c128_i32 = arith.constant 128 : i32
    %0 = arith.muli %arg1, %c128_i32 : i32
    %1 = tpu.assume_multiple %0, 128 : i32
    %c0 = arith.constant 0 : index
    %c0_0 = arith.constant 0 : index
    %2 = arith.index_cast %1 : i32 to index
    %3 = vector.load %arg2[%c0, %c0_0, %2] : memref<1x4x256xbf16, #tpu.memory_space<vmem>>, vector<1x4x256xbf16>
    %4 = vector.shape_cast %3 : vector<1x4x256xbf16> to vector<4x256xbf16>
    %c0_1 = arith.constant 0 : index
    %c0_2 = arith.constant 0 : index
    %5 = vector.load %arg3[%c0_1, %c0_2] : memref<8x4xbf16, #tpu.memory_space<vmem>>, vector<8x4xbf16>
    %cst = arith.constant dense<0.000000e+00> : vector<8x256xf32>
    %6 = tpu.matmul %5, %4, %cst {dimension_numbers = #tpu.dot_dimension_numbers<[1], [0], [0], [1], [0, 0, 1, 1], [], []>} : vector<8x4xbf16>, vector<4x256xbf16>, vector<8x256xf32> -> vector<8x256xf32>
    %7 = vector.extract_strided_slice %6 {offsets = [0, 1], sizes = [4, 128], strides = [1, 1]} : vector<8x256xf32> to vector<4x128xf32>
    %8 = vector.extract_strided_slice %6 {offsets = [4, 0], sizes = [4, 128], strides = [1, 1]} : vector<8x256xf32> to vector<4x128xf32>
    %9 = arith.addf %7, %8 : vector<4x128xf32>
    %c0_3 = arith.constant 0 : index
    %c0_4 = arith.constant 0 : index
    %10 = memref.load %arg4[%c0_3, %c0_4] : memref<1x1xf32, #tpu.memory_space<smem>>
    %11 = vector.broadcast %10 : f32 to vector<4x128xf32>
    %12 = arith.addf %9, %11 : vector<4x128xf32>
    %c0_5 = arith.constant 0 : index
    %c0_6 = arith.constant 0 : index
    %c0_7 = arith.constant 0 : index
    %13 = vector.load %arg5[%c0_5, %c0_6, %c0_7] : memref<1x4x128xf32, #tpu.memory_space<vmem>>, vector<1x4x128xf32>
    %14 = vector.shape_cast %13 : vector<1x4x128xf32> to vector<4x128xf32>
    %15 = vector.shape_cast %12 : vector<4x128xf32> to vector<1x4x128xf32>
    tpu.vector_store %arg5[%c0_5, %c0_6, %c0_7], %15 {strides = array<i32>} : memref<1x4x128xf32, #tpu.memory_space<vmem>>, vector<1x4x128xf32>,
    return
  }
  func.func @transform_0(%arg0: i32, %arg1: i32) -> (i32, i32, i32) {
    %c0_i32 = arith.constant 0 : i32
    %c0_i32_0 = arith.constant 0 : i32
    %c0_i32_1 = arith.constant 0 : i32
    return %arg0, %c0_i32, %c0_i32_0 : i32, i32, i32
  }
  func.func @transform_1(%arg0: i32, %arg1: i32) -> (i32, i32) {
    %c0_i32 = arith.constant 0 : i32
    %c0_i32_0 = arith.constant 0 : i32
    %c0_i32_1 = arith.constant 0 : i32
    return %c0_i32, %c0_i32_0 : i32, i32
  }
  func.func @transform_2(%arg0: i32, %arg1: i32) -> (i32, i32) {
    %c0_i32 = arith.constant 0 : i32
    %c0_i32_0 = arith.constant 0 : i32
    %c0_i32_1 = arith.constant 0 : i32
    return %c0_i32, %c0_i32_0 : i32, i32
  }
  func.func @transform_3(%arg0: i32, %arg1: i32) -> (i32, i32, i32) {
    %c0_i32 = arith.constant 0 : i32
    %c0_i32_0 = arith.constant 0 : i32
    return %arg0, %c0_i32, %arg1 : i32, i32, i32
  }
}

</mosaic_0001>

<llo_original>
// kernel: tpu_custom_call.1
$region0: #{tpu_custom_call.1}
  #allocation0 [shape = 'u32[]', space=smem, size = 0x4, offset = 0x4, fixed_abs, tag = 'smem constant byte address 0x4 - core index']
  #allocation1 [shape = 'u32[144,128]{1,0:T(1,128)}', space=vmem, size = 0x12000, scoped, tag = 'internal scratch']
  #allocation2 [shape = 'f32[1,1]{1,0:T(1,128)S(6)}', space=smem, size = 0x200, scoped, tag = 'scoped memory for tpu_custom_call.1']
  %s0 = inlined_call_operand.vmem [shape: bf16[2,4,256], index: 0, kind: input, shape index: {}]
  %s1 = inlined_call_operand.vmem [shape: bf16[8,4], index: 1, kind: input, shape index: {}]
  %s2 = inlined_call_operand.<no memory space> [shape: f32[1,1], index: 2, kind: input, shape index: {}]
  %s3 = inlined_call_operand.hbm [shape: f32[2,4,128], index: 3, kind: output, shape index: {}]
  %s4 = sld [smem:[#allocation0]]
  $region45: #{tpu_custom_call.1} parent=0
    _
  %s6 = ssub.s32 1, %s4
  %s7 = scalar_select 0, %s6, %s4
  %8 = sst [smem:[#allocation2]] %s2
  $region1: #{tpu_custom_call.1} parent=0
    #allocation3 [shape = 'u8[4096]{0}', space=vmem, size = 0x1000, scoped, tag = 'output window, operand 0']
    #allocation4 [shape = 's32[2]{0}', space=sflag, size = 0x8, scoped, tag = 'scoped memory for tpu_custom_call.1']
    %9 = vsyncpa [#allocation4], 0
    %s10 = scalar_lea.sflag [#allocation4], 1
    %11 = vsyncpa %s10, 0
    loop: start=0, step=1, limit=4
    $region2: #{tpu_custom_call.1} parent=1 // loop_pre_header
      _
    $region3: #{tpu_custom_call.1} parent=1 // loop_header
      %s13 = sphi 0, %s17
      %p14 = scmp.ge.s32.totalorder %s13, 4
      %s20 = sphi 0, %s32
      %s21 = sphi 0, %s28
      %s22 = sphi 0, %s20
      %s23 = sphi 0, %s21
      %s24 = sphi 0, %s22
      %s25 = sphi 0, %s23
      %s35 = sphi 0, %s37
      %s38 = sphi 0, %s35
      %s39 = sphi 0, %s38
      %s55 = sphi 0, %s39
      %s59 = sphi 0, %s59
      %s61 = sphi 0, %s59
      %s62 = sphi 0, %s61
      %s76 = sphi 0, %s62
      %s80 = sphi 0, %s80
      %s82 = sphi 0, %s80
      %s83 = sphi 0, %s82
      %s97 = sphi 0, %s83
      %s105 = sphi 0, %s107
      %s108 = sphi 0, %s105
      %s109 = sphi 0, %s108
      %s125 = sphi 0, %s109
    $region4: #{tpu_custom_call.1} parent=1 // loop_header_branch
      %16 = sbr.rel (%p14) target = $region8
    $region5: #{tpu_custom_call.1} parent=1 // loop_body
      %s18 = ssub.s32 %s13, 1
      %s19 = ssub.s32 %s13, 2
      %s26 = sadd.s32 1, %s21
      %p27 = scmp.ge.s32.totalorder %s26, 1
      %s28 = scalar_select %p27, 0, %s26
      %s29 = sadd.s32 1, %s20
      %s30 = scalar_select %p27, %s29, %s20
      %p31 = scmp.ge.s32.totalorder %s30, 2
      %s32 = scalar_select %p31, 0, %s30
      %s33 = ssub.s32 %s20, %s32
      %p34 = scmp.eq.s32.totalorder %s33, 0
      %s36 = sadd.s32 %s35, 1
      %s37 = scalar_select %p34, %s35, %s36
      %p40 = pneg %p34
      %p41 = scmp.eq.s32.totalorder %s13, 1
      %p42 = por %p40, %p41
      %p43 = scmp.ne.s32.totalorder %s35, %s38
      %p44 = scmp.eq.s32.totalorder %s13, 0
      %p45 = por %p43, %p44
      %p46 = scmp.ne.s32.totalorder %s35, %s38
      %p47 = scmp.eq.s32.totalorder %s18, 1
      %p48 = por %p46, %p47
      %p49 = scmp.ne.s32.totalorder %s38, %s39
      %p50 = scmp.eq.s32.totalorder %s18, 0
      %p51 = por %p49, %p50
      %p52 = scmp.ne.s32.totalorder %s38, %s39
      %p53 = scmp.eq.s32.totalorder %s19, 1
      %p54 = por %p52, %p53
      %p56 = scmp.ne.s32.totalorder %s39, %s55
      %p57 = scmp.eq.s32.totalorder %s19, 0
      %p58 = por %p56, %p57
      %s60 = sadd.s32 %s59, 1
      %p63 = scmp.eq.s32.totalorder %s13, 1
      %p64 = scmp.ne.s32.totalorder %s59, %s61
      %p65 = scmp.eq.s32.totalorder %s13, 0
      %p66 = por %p64, %p65
      %p67 = scmp.ne.s32.totalorder %s59, %s61
      %p68 = scmp.eq.s32.totalorder %s18, 1
      %p69 = por %p67, %p68
      %p70 = scmp.ne.s32.totalorder %s61, %s62
      %p71 = scmp.eq.s32.totalorder %s18, 0
      %p72 = por %p70, %p71
      %p73 = scmp.ne.s32.totalorder %s61, %s62
      %p74 = scmp.eq.s32.totalorder %s19, 1
      %p75 = por %p73, %p74
      %p77 = scmp.ne.s32.totalorder %s62, %s76
      %p78 = scmp.eq.s32.totalorder %s19, 0
      %p79 = por %p77, %p78
      %s81 = sadd.s32 %s80, 1
      %p84 = scmp.eq.s32.totalorder %s13, 1
      %p85 = scmp.ne.s32.totalorder %s80, %s82
      %p86 = scmp.eq.s32.totalorder %s13, 0
      %p87 = por %p85, %p86
      %p88 = scmp.ne.s32.totalorder %s80, %s82
      %p89 = scmp.eq.s32.totalorder %s18, 1
      %p90 = por %p88, %p89
      %p91 = scmp.ne.s32.totalorder %s82, %s83
      %p92 = scmp.eq.s32.totalorder %s18, 0
      %p93 = por %p91, %p92
      %p94 = scmp.ne.s32.totalorder %s82, %s83
      %p95 = scmp.eq.s32.totalorder %s19, 1
      %p96 = por %p94, %p95
      %p98 = scmp.ne.s32.totalorder %s83, %s97
      %p99 = scmp.eq.s32.totalorder %s19, 0
      %p100 = por %p98, %p99
      %s101 = ssub.s32 %s20, %s32
      %s102 = ssub.s32 %s21, %s28
      %s103 = sor.u32 %s101, %s102
      %p104 = scmp.eq.s32.totalorder %s103, 0
      %s106 = sadd.s32 %s105, 1
      %s107 = scalar_select %p104, %s105, %s106
      %p110 = pneg %p104
      %p111 = scmp.eq.s32.totalorder %s13, 1
      %p112 = por %p110, %p111
      %p113 = scmp.ne.s32.totalorder %s105, %s108
      %p114 = scmp.eq.s32.totalorder %s13, 0
      %p115 = por %p113, %p114
      %p116 = scmp.ne.s32.totalorder %s105, %s108
      %p117 = scmp.eq.s32.totalorder %s18, 1
      %p118 = por %p116, %p117
      %p119 = scmp.ne.s32.totalorder %s108, %s109
      %p120 = scmp.eq.s32.totalorder %s18, 0
      %p121 = por %p119, %p120
      %p122 = scmp.ne.s32.totalorder %s108, %s109
      %p123 = scmp.eq.s32.totalorder %s19, 1
      %p124 = por %p122, %p123
      %p126 = scmp.ne.s32.totalorder %s109, %s125
      %p127 = scmp.eq.s32.totalorder %s19, 0
      %p128 = por %p126, %p127
      %p129 = scmp.le.s32.totalorder 1, %s13
      %p130 = scmp.lt.s32.totalorder %s13, 3
      %p131 = pnand %p129, %p130
      %p132 = pneg %p131
      // Predicated region
      $region9: #{tpu_custom_call.1} parent=5 // pred_check
        _
      $region10: #{tpu_custom_call.1} parent=5 // pred_check_branch
        %134 = sbr.rel (%p131) target = $region12
      $region11: #{tpu_custom_call.1} parent=5 // pred_region
        %s135 = ssub.s32 %s13, 1
        // Predicated region
        $region13: #{tpu_custom_call.1} parent=11 // pred_check
          %p136 = pneg %p72
        $region14: #{tpu_custom_call.1} parent=11 // pred_check_branch
          %138 = sbr.rel (%p136) target = $region16
        $region15: #{tpu_custom_call.1} parent=11 // pred_region
          _
        $region16: #{tpu_custom_call.1} parent=11 // pred_fallthru
          _
        // Predicated region
        $region17: #{tpu_custom_call.1} parent=11 // pred_check
          %p139 = pneg %p93
        $region18: #{tpu_custom_call.1} parent=11 // pred_check_branch
          %141 = sbr.rel (%p139) target = $region20
        $region19: #{tpu_custom_call.1} parent=11 // pred_region
          _
        $region20: #{tpu_custom_call.1} parent=11 // pred_fallthru
          _
      $region12: #{tpu_custom_call.1} parent=5 // pred_fallthru
        _
      %p142 = scmp.lt.s32.totalorder %s13, 2
      // Predicated region
      $region21: #{tpu_custom_call.1} parent=5 // pred_check
        %p143 = pneg %p142
      $region22: #{tpu_custom_call.1} parent=5 // pred_check_branch
        %145 = sbr.rel (%p143) target = $region24
      $region23: #{tpu_custom_call.1} parent=5 // pred_region
        // Predicated region
        $region25: #{tpu_custom_call.1} parent=23 // pred_check
          %p146 = pneg %p45
        $region26: #{tpu_custom_call.1} parent=23 // pred_check_branch
          %148 = sbr.rel (%p146) target = $region28
        $region27: #{tpu_custom_call.1} parent=23 // pred_region
          %p149 = scmp.lt.s32.totalorder %s20, 1
          %s150 = scalar_select %p149, %s20, 1
          %s151 = smul.addr %s150, 2
          %s152 = smul.addr %s151, 2
          %s153 = scalar_lea.vmem %s0, %s152
        $region28: #{tpu_custom_call.1} parent=23 // pred_fallthru
          _
      $region24: #{tpu_custom_call.1} parent=5 // pred_fallthru
        _
      %p154 = scmp.le.s32.totalorder 1, %s13
      %p155 = scmp.lt.s32.totalorder %s13, 3
      %p156 = pnand %p154, %p155
      %p157 = pneg %p156
      // Predicated region
      $region29: #{tpu_custom_call.1} parent=5 // pred_check
        _
      $region30: #{tpu_custom_call.1} parent=5 // pred_check_branch
        %159 = sbr.rel (%p156) target = $region32
      $region31: #{tpu_custom_call.1} parent=5 // pred_region
        %s160 = ssub.s32 %s13, 1
        %p161 = scmp.lt.s32.totalorder %s22, 1
        %s162 = scalar_select %p161, %s22, 1
        %s163 = smul.addr %s162, 2
        %s164 = smul.addr %s163, 2
        %s165 = scalar_lea.vmem %s0, %s164
        %p166 = pneg %p51
        %p167 = pneg %p48
        %p168 = pneg %p72
        %p169 = pneg %p69
        %p170 = pneg %p93
        %p171 = pneg %p90
        %p172 = pneg %p121
        %p173 = pneg %p118
        %s174 = sand.u32 %s108, 1
        %s175 = scalar_lea.sflag [#allocation4], %s174
        %s176 = sand.u32 %s108, 1
        %s177 = smul.addr %s176, 4
        %s178 = scalar_lea.vmem [#allocation3], %s177
        %p179 = scmp.lt.s32.totalorder %s22, 1
        %s180 = scalar_select %p179, %s22, 1
        %s181 = smul.addr %s180, 2
        %s182 = smul.addr %s181, 2
        %s183 = scalar_lea.vmem %s0, %s182
        %s185 = smul.u32 %s23, 128
        %s186 = sshra.s32 %s185, 7
        %s187 = sand.u32 %s185, 127
        %s188 = smul.addr %s186, 2
        %s189 = scalar_lea.vmem %s183, %s188
        %v190 = vld [vmem:[%s189] sm:$0xf]
        %v191 = vld [vmem:[%s1] sm:$0xf]
        %v194 = vunpack.c.l.s4 1983009808
        %v195 = vunpack.c.0.s8 %v194
        %v196 = vlaneseq
        %v197 = vshrl.u32 %v196, 7
        %v198 = vsub.s32 %v195, %v197
        %v199 = vrot.slane %v190, %v198
        %v200 = vcombine.high %v199, %v199
        %vm201 = vcmask 31744
        %v203 = vsel %vm201, %v191, 0
        %vm205 = vcmask 1041408
        %v207 = vsel %vm205, %v199, 0
        %v210 = vsel %vm205, %v200, 0
        %212 = vmatprep.subr.bf16.mxu0 %v210
        %213 = vmatpush1.bf16.msra.mxu0 %v207
        %214 = vmatprep.subr.bf16.mxu0 0
        %215 = vmatpush1.bf16.msra.mxu0 0
        %216 = vmatprep.subr.bf16.mxu0 0
        %217 = vmatpush1.bf16.msra.mxu0 0
        %218 = vmatprep.subr.bf16.mxu0 0
        %219 = vmatpush1.bf16.msra.mxu0 0
        %220 = vmatprep.subr.bf16.mxu0 0
        %221 = vmatpush1.bf16.msra.mxu0 0
        %222 = vmatprep.subr.bf16.mxu0 0
        %223 = vmatpush1.bf16.msra.mxu0 0
        %224 = vmatprep.subr.bf16.mxu0 0
        %225 = vmatpush1.bf16.msra.mxu0 0
        %226 = vmatprep.subr.bf16.mxu0 0
        %227 = vmatpush1.bf16.msra.mxu0 0
        %228 = vmatprep.subr.bf16.mxu0 0
        %229 = vmatpush1.bf16.msra.mxu0 0
        %230 = vmatprep.subr.bf16.mxu0 0
        %231 = vmatpush1.bf16.msra.mxu0 0
        %232 = vmatprep.subr.bf16.mxu0 0
        %233 = vmatpush1.bf16.msra.mxu0 0
        %234 = vmatprep.subr.bf16.mxu0 0
        %235 = vmatpush1.bf16.msra.mxu0 0
        %236 = vmatprep.subr.bf16.mxu0 0
        %237 = vmatpush1.bf16.msra.mxu0 0
        %238 = vmatprep.subr.bf16.mxu0 0
        %239 = vmatpush1.bf16.msra.mxu0 0
        %240 = vmatprep.subr.bf16.mxu0 0
        %241 = vmatpush1.bf16.msra.mxu0 0
        %242 = vmatprep.subr.bf16.mxu0 0
        %243 = vmatpush1.bf16.msra.mxu0 0
        %244 = vmatprep.mubr.bf16.mxu0 0
        %245 = vmatmul.mubr.bf16.gmra.mrb[0].mxu0 %v203
        %v246 = vpop.f32.mrb[0].mxu0
        %v247 = vadd.f32 0.0, %v246
        %v248 = vpop.f32.mrb[0].mxu0
        %v249 = vadd.f32 0.0, %v248
        %v250 = vpop.f32.mrb[0].mxu0
        %v251 = vpop.f32.mrb[0].mxu0
        %252 = vdwg.mxu0
        %v254 = vrot.slane %v247, 4
        %255 = vrot.lane.b32.xlu0 %v254, 1
        %v256 = vpop.permute.xlu0 %255
        %v258 = vadd.f32 %v247, %v256
        %v259 = vadd.f32 %v249, %v256
        %s260 = sld [smem:[#allocation2]]
        %v261 = vstv %s260
        %v262 = vadd.f32 %v258, %v261
        %v263 = vadd.f32 %v259, %v261
        %266 = vrot.lane.b32.xlu0 %v262, 127
        %v267 = vpop.permute.xlu0 %266
        %268 = vrot.lane.b32.xlu0 %v263, 127
        %v269 = vpop.permute.xlu0 %268
        %vm270 = vcmask 1039360
        %v271 = vsel %vm270, %v267, %v269
        %273 = vst [vmem:[%s178] sm:$0xf] %v271
        %s274 = sand.u32 %s108, 1
        %s275 = scalar_lea.sflag [#allocation4], %s274
        %s276 = sand.u32 %s108, 1
        %s277 = smul.addr %s276, 4
        %s278 = scalar_lea.vmem [#allocation3], %s277
        // Predicated region
        $region33: #{tpu_custom_call.1} parent=31 // pred_check
          %p279 = pneg %p118
        $region34: #{tpu_custom_call.1} parent=31 // pred_check_branch
          %281 = sbr.rel (%p279) target = $region36
        $region35: #{tpu_custom_call.1} parent=31 // pred_region
          %s283 = ssub.s32 64, 64
          %284 = vsyncadd %s275, %s283
          %s285 = sadd.s32 %s23, %s22
          %s286 = smul.addr %s285, 64
          %s287 = scalar_lea.hbm %s3, %s286
          %s289 = sshll.u32 %s278, 4
          %s290 = int_to_ptr.vmem [resolvable:$true] %s289
          %292 = dma.vmem_to_hbm [thread:$0]  %s290, 64, %s287, %s275
        $region36: #{tpu_custom_call.1} parent=31 // pred_fallthru
          _
      $region32: #{tpu_custom_call.1} parent=5 // pred_fallthru
        _
      %p293 = scmp.le.s32.totalorder 2, %s13
      // Predicated region
      $region37: #{tpu_custom_call.1} parent=5 // pred_check
        %p294 = pneg %p293
      $region38: #{tpu_custom_call.1} parent=5 // pred_check_branch
        %296 = sbr.rel (%p294) target = $region40
      $region39: #{tpu_custom_call.1} parent=5 // pred_region
        %s297 = ssub.s32 %s13, 2
        // Predicated region
        $region41: #{tpu_custom_call.1} parent=39 // pred_check
          %p298 = pneg %p124
        $region42: #{tpu_custom_call.1} parent=39 // pred_check_branch
          %300 = sbr.rel (%p298) target = $region44
        $region43: #{tpu_custom_call.1} parent=39 // pred_region
          %s301 = sand.u32 %s109, 1
          %s302 = scalar_lea.sflag [#allocation4], %s301
          %s303 = sand.u32 %s109, 1
          %s304 = smul.addr %s303, 4
          %s305 = scalar_lea.vmem [#allocation3], %s304
          %306 = dma.done %s302, 64
        $region44: #{tpu_custom_call.1} parent=39 // pred_fallthru
          _
      $region40: #{tpu_custom_call.1} parent=5 // pred_fallthru
        _
    $region6: #{tpu_custom_call.1} parent=1 // loop_footer
      %s17 = sadd.s32 1, %s13
    $region7: #{tpu_custom_call.1} parent=1 // loop_footer_branch
      %12 = sbr.rel target = $region3
    $region8: #{tpu_custom_call.1} parent=1 // loop_exit
      _
    %307 = vsyncpa [#allocation4], 1
    %s308 = scalar_lea.sflag [#allocation4], 1
    %309 = vsyncpa %s308, 1

</llo_original>
